<compile_context>
chip_gen: v6e
topology: v6e:2x2x1
jax: 0.10.0
libtpu: 0.0.40
codegen_flags: <defaults>
</compile_context>

<pallas_src>
import functools

import jax
import jax.numpy as jnp
from jax.experimental import pallas as pl
from jax.experimental.pallas import tpu as pltpu


def _channel_attention_kernel(x_ref, w1_ref, w2_ref, o_ref, acc_ref, *,
                              inv_hw, n_batch):
    """One grid step processes an (N, thw, C) spatial tile of x.

    acc_ref is a persistent VMEM scratch of shape (2N, C):
      rows [0:N)   -> running per-channel spatial sum
      rows [N:2N)  -> running per-channel spatial max
    """
    i = pl.program_id(0)
    c = acc_ref.shape[1]

    @pl.when(i == 0)
    def _init():
        acc_ref[pl.ds(0, n_batch), :] = jnp.zeros((n_batch, c), jnp.float32)
        acc_ref[pl.ds(n_batch, n_batch), :] = jnp.full((n_batch, c), -jnp.inf,
                                                       jnp.float32)

    # Accumulate this spatial tile.  Per-batch 2D reductions (sublane-axis
    # reduce on (thw, C)) keep channels lane-dense.
    for b in range(n_batch):                       # n_batch is small & static
        xb = x_ref[b]                              # (thw, C) f32
        s = jnp.sum(xb, axis=0, keepdims=True)     # (1, C)
        m = jnp.max(xb, axis=0, keepdims=True)     # (1, C)
        acc_ref[pl.ds(b, 1), :] = acc_ref[pl.ds(b, 1), :] + s
        acc_ref[pl.ds(n_batch + b, 1), :] = jnp.maximum(
            acc_ref[pl.ds(n_batch + b, 1), :], m)

    @pl.when(i == pl.num_programs(0) - 1)
    def _finalize():
        pooled = acc_ref[...]                                  # (2N, C)
        row = jax.lax.broadcasted_iota(jnp.int32, pooled.shape, 0)
        # sum rows -> mean (AdaptiveAvgPool2d(1)); max rows stay as-is.
        pooled = jnp.where(row < n_batch, pooled * inv_hw, pooled)
        # Shared MLP, batched across N and across the avg/max branch:
        # (2N, C) @ (C, Cr) -> ReLU -> (2N, Cr) @ (Cr, C)
        h = jnp.maximum(
            jnp.dot(pooled, w1_ref[...], preferred_element_type=jnp.float32),
            0.0)
        y = jnp.dot(h, w2_ref[...], preferred_element_type=jnp.float32)
        s = y[:n_batch] + y[n_batch:]                          # avg_out + max_out
        o_ref[...] = 1.0 / (1.0 + jnp.exp(-s))                 # sigmoid, (N, C)


def _pick_spatial_tile(hw, n, c, *, block_budget_bytes):
    """Largest spatial tile (rows of HW) that keeps the x block within budget,
    is a multiple of 8, and divides HW exactly (else fall back to full HW)."""
    bytes_per_row = n * c * 4
    max_rows = max(block_budget_bytes // bytes_per_row, 8)
    if hw <= max_rows:
        return hw
    t = (max_rows // 8) * 8
    while t >= 8:
        if hw % t == 0:
            return t
        t -= 8
    # TODO(synk): pad HW (with count-corrected mean / -inf max) for ragged
    # spatial sizes instead of falling back to a whole-array block.
    return hw


def channel_attention(x_nchw, w1, w2, *, block_budget_bytes=8 * 1024 * 1024):
    """sigmoid(fc(avgpool(x)) + fc(maxpool(x))) with fc = W2 @ relu(W1 @ .).

    x_nchw: (N, C, H, W) f32
    w1:     (C, C//r)  == PyTorch Conv2d(C, C//r, 1).weight[:, :, 0, 0].T
    w2:     (C//r, C)  == PyTorch Conv2d(C//r, C, 1).weight[:, :, 0, 0].T
    returns (N, C, 1, 1) f32
    """
    N, C, H, W = x_nchw.shape
    HW = H * W
    Cr = w1.shape[1]
    x3 = jnp.transpose(x_nchw, (0, 2, 3, 1)).reshape(N, HW, C)

    thw = _pick_spatial_tile(HW, N, C, block_budget_bytes=block_budget_bytes)
    n_tiles = HW // thw

    out = pl.pallas_call(
        functools.partial(_channel_attention_kernel,
                          inv_hw=1.0 / float(HW), n_batch=N),
        out_shape=jax.ShapeDtypeStruct((N, C), jnp.float32),
        grid_spec=pltpu.PrefetchScalarGridSpec(
            num_scalar_prefetch=0,
            grid=(n_tiles,),
            in_specs=[
                pl.BlockSpec((N, thw, C), lambda i: (0, i, 0)),
                pl.BlockSpec((C, Cr), lambda i: (0, 0)),   # resident across grid
                pl.BlockSpec((Cr, C), lambda i: (0, 0)),   # resident across grid
            ],
            out_specs=pl.BlockSpec((N, C), lambda i: (0, 0)),
            scratch_shapes=[pltpu.VMEM((2 * N, C), jnp.float32)],
        ),
        compiler_params=pltpu.CompilerParams(
            dimension_semantics=("arbitrary",),       # reduction over HW tiles
            vmem_limit_bytes=32 * 1024 * 1024,        # explicit; safe on v7x 64 MiB
        ),
    )(x3, w1, w2)
    return out.reshape(N, C, 1, 1)


if __name__ == "__main__":
    key = jax.random.PRNGKey(0)
    k_x, k_w1, k_w2 = jax.random.split(key, 3)

    N, C, H, W = 2, 32, 16, 16
    reduction_ratio = 16
    Cr = max(C // reduction_ratio, 1)

    x = jax.random.normal(k_x, (N, C, H, W), jnp.float32)
    # PyTorch Conv2d weights: (out, in, 1, 1), bias=False.
    w1_torch = jax.random.normal(k_w1, (Cr, C, 1, 1), jnp.float32) * 0.1
    w2_torch = jax.random.normal(k_w2, (C, Cr, 1, 1), jnp.float32) * 0.1
    w1 = w1_torch[:, :, 0, 0].T    # (C, Cr)
    w2 = w2_torch[:, :, 0, 0].T    # (Cr, C)

    out = channel_attention(x, w1, w2)
    out = jax.block_until_ready(out)
    assert out.shape == (N, C, 1, 1)

    # Pure-JAX reference (same math as the PyTorch forward).
    avg = x.mean(axis=(2, 3))                               # AdaptiveAvgPool2d(1)
    mx = x.max(axis=(2, 3))                                 # AdaptiveMaxPool2d(1)
    fc = lambda v: jnp.maximum(v @ w1, 0.0) @ w2
    ref = (1.0 / (1.0 + jnp.exp(-(fc(avg) + fc(mx)))))[:, :, None, None]
    assert jnp.allclose(out, ref, rtol=1e-5, atol=1e-5), float(
        jnp.max(jnp.abs(out - ref)))

    # Also exercise the multi-tile (pipelined reduction) path with a tiny budget.
    out_tiled = jax.block_until_ready(
        channel_attention(x, w1, w2, block_budget_bytes=8 * 1024))
    assert jnp.allclose(out_tiled, ref, rtol=1e-5, atol=1e-5), float(
        jnp.max(jnp.abs(out_tiled - ref)))

    print("KERNEL_OK")
</pallas_src>

<mosaic_0001>
module attributes {stable_mosaic.version = 11 : i64} {
  func.func @_channel_attention_kernel(%arg0: i32, %arg1: memref<2x256x32xf32, #tpu.memory_space<vmem>>, %arg2: memref<32x2xf32, #tpu.memory_space<vmem>>, %arg3: memref<2x32xf32, #tpu.memory_space<vmem>>, %arg4: memref<2x32xf32, #tpu.memory_space<vmem>>, %arg5: memref<4x32xf32, #tpu.memory_space<vmem>>) attributes {dimension_semantics = [#tpu.dimension_semantics<arbitrary>], iteration_bounds = array<i64: 1>, scalar_prefetch = 0 : i64, scratch_operands = 1 : i64, tpu.core_type = #tpu.core_type<tc>, window_params = [{transform_indices = @transform_0, window_bounds = array<i64: 2, 256, 32>}, {pipeline_mode = #tpu.pipeline_mode<synchronous>, transform_indices = @transform_1, window_bounds = array<i64: 32, 2>}, {pipeline_mode = #tpu.pipeline_mode<synchronous>, transform_indices = @transform_2, window_bounds = array<i64: 2, 32>}, {pipeline_mode = #tpu.pipeline_mode<synchronous>, transform_indices = @transform_3, window_bounds = array<i64: 2, 32>}]} {
    %c0_i32 = arith.constant 0 : i32
    %0 = arith.cmpi eq, %arg0, %c0_i32 : i32
    %1 = arith.extui %0 : i1 to i32
    %c0_i32_0 = arith.constant 0 : i32
    %2 = arith.cmpi ne, %1, %c0_i32_0 : i32
    scf.if %2 {
      %cst_24 = arith.constant 0.000000e+00 : f32
      %30 = vector.broadcast %cst_24 : f32 to vector<2x32xf32>
      %c0_25 = arith.constant 0 : index
      %c0_26 = arith.constant 0 : index
      %31 = vector.load %arg5[%c0_25, %c0_26] : memref<4x32xf32, #tpu.memory_space<vmem>>, vector<2x32xf32>
      tpu.vector_store %arg5[%c0_25, %c0_26], %30 {strides = array<i32>} : memref<4x32xf32, #tpu.memory_space<vmem>>, vector<2x32xf32>,
      %cst_27 = arith.constant 0xFF800000 : f32
      %32 = vector.broadcast %cst_27 : f32 to vector<2x32xf32>
      %c2_28 = arith.constant 2 : index
      %c0_29 = arith.constant 0 : index
      %33 = vector.load %arg5[%c2_28, %c0_29] : memref<4x32xf32, #tpu.memory_space<vmem>>, vector<2x32xf32>
      tpu.vector_store %arg5[%c2_28, %c0_29], %32 {strides = array<i32>} : memref<4x32xf32, #tpu.memory_space<vmem>>, vector<2x32xf32>,
    } else {
    }
    %c0 = arith.constant 0 : index
    %c0_1 = arith.constant 0 : index
    %c0_2 = arith.constant 0 : index
    %3 = vector.load %arg1[%c0, %c0_1, %c0_2] : memref<2x256x32xf32, #tpu.memory_space<vmem>>, vector<1x256x32xf32>
    %4 = vector.shape_cast %3 : vector<1x256x32xf32> to vector<256x32xf32>
    %cst = arith.constant dense<0.000000e+00> : vector<32xf32>
    %5 = vector.multi_reduction <add>, %4, %cst [0] : vector<256x32xf32> to vector<32xf32>
    %6 = vector.shape_cast %5 : vector<32xf32> to vector<1x32xf32>
    %cst_3 = arith.constant dense<0xFF800000> : vector<32xf32>
    %7 = vector.multi_reduction <maximumf>, %4, %cst_3 [0] : vector<256x32xf32> to vector<32xf32>
    %8 = vector.shape_cast %7 : vector<32xf32> to vector<1x32xf32>
    %c0_4 = arith.constant 0 : index
    %c0_5 = arith.constant 0 : index
    %9 = vector.load %arg5[%c0_4, %c0_5] : memref<4x32xf32, #tpu.memory_space<vmem>>, vector<1x32xf32>
    %10 = arith.addf %9, %6 : vector<1x32xf32>
    %c0_6 = arith.constant 0 : index
    %c0_7 = arith.constant 0 : index
    %11 = vector.load %arg5[%c0_6, %c0_7] : memref<4x32xf32, #tpu.memory_space<vmem>>, vector<1x32xf32>
    tpu.vector_store %arg5[%c0_6, %c0_7], %10 {strides = array<i32>} : memref<4x32xf32, #tpu.memory_space<vmem>>, vector<1x32xf32>,
    %c2 = arith.constant 2 : index
    %c0_8 = arith.constant 0 : index
    %12 = vector.load %arg5[%c2, %c0_8] : memref<4x32xf32, #tpu.memory_space<vmem>>, vector<1x32xf32>
    %13 = arith.maximumf %12, %8 : vector<1x32xf32>
    %c2_9 = arith.constant 2 : index
    %c0_10 = arith.constant 0 : index
    %14 = vector.load %arg5[%c2_9, %c0_10] : memref<4x32xf32, #tpu.memory_space<vmem>>, vector<1x32xf32>
    tpu.vector_store %arg5[%c2_9, %c0_10], %13 {strides = array<i32>} : memref<4x32xf32, #tpu.memory_space<vmem>>, vector<1x32xf32>,
    %c1 = arith.constant 1 : index
    %c0_11 = arith.constant 0 : index
    %c0_12 = arith.constant 0 : index
    %15 = vector.load %arg1[%c1, %c0_11, %c0_12] : memref<2x256x32xf32, #tpu.memory_space<vmem>>, vector<1x256x32xf32>
    %16 = vector.shape_cast %15 : vector<1x256x32xf32> to vector<256x32xf32>
    %cst_13 = arith.constant dense<0.000000e+00> : vector<32xf32>
    %17 = vector.multi_reduction <add>, %16, %cst_13 [0] : vector<256x32xf32> to vector<32xf32>
    %18 = vector.shape_cast %17 : vector<32xf32> to vector<1x32xf32>
    %cst_14 = arith.constant dense<0xFF800000> : vector<32xf32>
    %19 = vector.multi_reduction <maximumf>, %16, %cst_14 [0] : vector<256x32xf32> to vector<32xf32>
    %20 = vector.shape_cast %19 : vector<32xf32> to vector<1x32xf32>
    %c1_15 = arith.constant 1 : index
    %c0_16 = arith.constant 0 : index
    %21 = vector.load %arg5[%c1_15, %c0_16] : memref<4x32xf32, #tpu.memory_space<vmem>>, vector<1x32xf32>
    %22 = arith.addf %21, %18 : vector<1x32xf32>
    %c1_17 = arith.constant 1 : index
    %c0_18 = arith.constant 0 : index
    %23 = vector.load %arg5[%c1_17, %c0_18] : memref<4x32xf32, #tpu.memory_space<vmem>>, vector<1x32xf32>
    tpu.vector_store %arg5[%c1_17, %c0_18], %22 {strides = array<i32>} : memref<4x32xf32, #tpu.memory_space<vmem>>, vector<1x32xf32>,
    %c3 = arith.constant 3 : index
    %c0_19 = arith.constant 0 : index
    %24 = vector.load %arg5[%c3, %c0_19] : memref<4x32xf32, #tpu.memory_space<vmem>>, vector<1x32xf32>
    %25 = arith.maximumf %24, %20 : vector<1x32xf32>
    %c3_20 = arith.constant 3 : index
    %c0_21 = arith.constant 0 : index
    %26 = vector.load %arg5[%c3_20, %c0_21] : memref<4x32xf32, #tpu.memory_space<vmem>>, vector<1x32xf32>
    tpu.vector_store %arg5[%c3_20, %c0_21], %25 {strides = array<i32>} : memref<4x32xf32, #tpu.memory_space<vmem>>, vector<1x32xf32>,
    %c0_i32_22 = arith.constant 0 : i32
    %27 = arith.cmpi eq, %arg0, %c0_i32_22 : i32
    %28 = arith.extui %27 : i1 to i32
    %c0_i32_23 = arith.constant 0 : i32
    %29 = arith.cmpi ne, %28, %c0_i32_23 : i32
    scf.if %29 {
      %c0_24 = arith.constant 0 : index
      %c0_25 = arith.constant 0 : index
      %30 = vector.load %arg5[%c0_24, %c0_25] : memref<4x32xf32, #tpu.memory_space<vmem>>, vector<4x32xf32>
      %31 = tpu.iota {dimensions = array<i32: 0>} : vector<4x32xi32>
      %c2_i32 = arith.constant 2 : i32
      %32 = vector.broadcast %c2_i32 : i32 to vector<4x32xi32>
      %33 = arith.cmpi slt, %31, %32 : vector<4x32xi32>
      %cst_26 = arith.constant 3.906250e-03 : f32
      %34 = vector.broadcast %cst_26 : f32 to vector<4x32xf32>
      %35 = arith.mulf %30, %34 : vector<4x32xf32>
      %36 = arith.select %33, %35, %30 : vector<4x32xi1>, vector<4x32xf32>
      %c0_27 = arith.constant 0 : index
      %c0_28 = arith.constant 0 : index
      %37 = vector.load %arg2[%c0_27, %c0_28] : memref<32x2xf32, #tpu.memory_space<vmem>>, vector<32x2xf32>
      %cst_29 = arith.constant dense<0.000000e+00> : vector<4x2xf32>
      %38 = tpu.matmul %36, %37, %cst_29 {dimension_numbers = #tpu.dot_dimension_numbers<[1], [0], [0], [1], [0, 0, 1, 1], [], []>} : vector<4x32xf32>, vector<32x2xf32>, vector<4x2xf32> -> vector<4x2xf32>
      %cst_30 = arith.constant 0.000000e+00 : f32
      %39 = vector.broadcast %cst_30 : f32 to vector<4x2xf32>
      %40 = arith.maximumf %38, %39 : vector<4x2xf32>
      %c0_31 = arith.constant 0 : index
      %c0_32 = arith.constant 0 : index
      %41 = vector.load %arg3[%c0_31, %c0_32] : memref<2x32xf32, #tpu.memory_space<vmem>>, vector<2x32xf32>
      %cst_33 = arith.constant dense<0.000000e+00> : vector<4x32xf32>
      %42 = tpu.matmul %40, %41, %cst_33 {dimension_numbers = #tpu.dot_dimension_numbers<[1], [0], [0], [1], [0, 0, 1, 1], [], []>} : vector<4x2xf32>, vector<2x32xf32>, vector<4x32xf32> -> vector<4x32xf32>
      %43 = vector.extract_strided_slice %42 {offsets = [0, 0], sizes = [2, 32], strides = [1, 1]} : vector<4x32xf32> to vector<2x32xf32>
      %44 = vector.extract_strided_slice %42 {offsets = [2, 0], sizes = [2, 32], strides = [1, 1]} : vector<4x32xf32> to vector<2x32xf32>
      %45 = arith.addf %43, %44 : vector<2x32xf32>
      %cst_34 = arith.constant 0.000000e+00 : f32
      %46 = vector.broadcast %cst_34 : f32 to vector<2x32xf32>
      %47 = arith.subf %46, %45 : vector<2x32xf32>
      %48 = math.exp %47 : vector<2x32xf32>
      %cst_35 = arith.constant 1.000000e+00 : f32
      %49 = vector.broadcast %cst_35 : f32 to vector<2x32xf32>
      %50 = arith.addf %49, %48 : vector<2x32xf32>
      %cst_36 = arith.constant 1.000000e+00 : f32
      %51 = vector.broadcast %cst_36 : f32 to vector<2x32xf32>
      %52 = arith.divf %51, %50 : vector<2x32xf32>
      %c0_37 = arith.constant 0 : index
      %c0_38 = arith.constant 0 : index
      %53 = vector.load %arg4[%c0_37, %c0_38] : memref<2x32xf32, #tpu.memory_space<vmem>>, vector<2x32xf32>
      tpu.vector_store %arg4[%c0_37, %c0_38], %52 {strides = array<i32>} : memref<2x32xf32, #tpu.memory_space<vmem>>, vector<2x32xf32>,
    } else {
    }
    return
  }
  func.func @transform_0(%arg0: i32) -> (i32, i32, i32) {
    %c0_i32 = arith.constant 0 : i32
    %c0_i32_0 = arith.constant 0 : i32
    %c0_i32_1 = arith.constant 0 : i32
    return %c0_i32, %arg0, %c0_i32_0 : i32, i32, i32
  }
  func.func @transform_1(%arg0: i32) -> (i32, i32) {
    %c0_i32 = arith.constant 0 : i32
    %c0_i32_0 = arith.constant 0 : i32
    %c0_i32_1 = arith.constant 0 : i32
    return %c0_i32, %c0_i32_0 : i32, i32
  }
  func.func @transform_2(%arg0: i32) -> (i32, i32) {
    %c0_i32 = arith.constant 0 : i32
    %c0_i32_0 = arith.constant 0 : i32
    %c0_i32_1 = arith.constant 0 : i32
    return %c0_i32, %c0_i32_0 : i32, i32
  }
  func.func @transform_3(%arg0: i32) -> (i32, i32) {
    %c0_i32 = arith.constant 0 : i32
    %c0_i32_0 = arith.constant 0 : i32
    %c0_i32_1 = arith.constant 0 : i32
    return %c0_i32, %c0_i32_0 : i32, i32
  }
}

</mosaic_0001>

<llo_original>
// kernel: tpu_custom_call.1
$region0: #{tpu_custom_call.1}
  #allocation0 [shape = 'u32[]', space=smem, size = 0x4, offset = 0x4, fixed_abs, tag = 'smem constant byte address 0x4 - core index']
  #allocation1 [shape = 'u32[144,128]{1,0:T(1,128)}', space=vmem, size = 0x12000, scoped, tag = 'internal scratch']
  #allocation2 [shape = 'f32[4,32]{1,0:T(4,128)}', space=vmem, size = 0x800, scoped, tag = 'scratch operand']
  %s0 = inlined_call_operand.vmem [shape: f32[2,256,32], index: 0, kind: input, shape index: {}]
  %s1 = inlined_call_operand.vmem [shape: f32[32,2], index: 1, kind: input, shape index: {}]
  %s2 = inlined_call_operand.vmem [shape: f32[2,32], index: 2, kind: input, shape index: {}]
  %s3 = inlined_call_operand.hbm [shape: f32[2,32], index: 3, kind: output, shape index: {}]
  %s4 = sld [smem:[#allocation0]]
  $region30: #{tpu_custom_call.1} parent=0
    _
  %s6 = ssub.s32 1, %s4
  %s7 = scalar_select 0, %s6, %s4
  $region1: #{tpu_custom_call.1} parent=0
    #allocation3 [shape = 'u8[1024]{0}', space=vmem, size = 0x400, scoped, tag = 'output window, operand 0, single buffered']
    #allocation4 [shape = 's32[1]{0}', space=sflag, size = 0x4, scoped, tag = 'scoped memory for tpu_custom_call.1']
    %8 = vsyncpa [#allocation4], 0
    // Predicated region
    $region2: #{tpu_custom_call.1} parent=1 // pred_check
      _
    $region3: #{tpu_custom_call.1} parent=1 // pred_check_branch
      %10 = sbr.rel (0) target = $region5
    $region4: #{tpu_custom_call.1} parent=1 // pred_region
      _
    $region5: #{tpu_custom_call.1} parent=1 // pred_fallthru
      _
    // Predicated region
    $region6: #{tpu_custom_call.1} parent=1 // pred_check
      _
    $region7: #{tpu_custom_call.1} parent=1 // pred_check_branch
      %12 = sbr.rel (0) target = $region9
    $region8: #{tpu_custom_call.1} parent=1 // pred_region
      _
    $region9: #{tpu_custom_call.1} parent=1 // pred_fallthru
      _
    // Predicated region
    $region10: #{tpu_custom_call.1} parent=1 // pred_check
      _
    $region11: #{tpu_custom_call.1} parent=1 // pred_check_branch
      %14 = sbr.rel (0) target = $region13
    $region12: #{tpu_custom_call.1} parent=1 // pred_region
      _
    $region13: #{tpu_custom_call.1} parent=1 // pred_fallthru
      _
    %p15 = scmp.eq.s32.totalorder 0, 0
    // Predicated region
    $region14: #{tpu_custom_call.1} parent=1 // pred_check
      %p16 = pneg %p15
    $region15: #{tpu_custom_call.1} parent=1 // pred_check_branch
      %18 = sbr.rel (%p16) target = $region17
    $region16: #{tpu_custom_call.1} parent=1 // pred_region
      %vm19 = vcmask 254976
      %20 = vst.msk [vmem:[#allocation2] sm:$0x3] %vm19, 0.0
      %21 = vst.msk [vmem:[#allocation2 + $0x2] sm:$0x3] %vm19, -inf
    $region17: #{tpu_custom_call.1} parent=1 // pred_fallthru
      _
    %v22 = vld [vmem:[%s0] sm:$0xff]
    %v23 = vld [vmem:[%s0 + $0x8] sm:$0xff]
    %v24 = vld [vmem:[%s0 + $0x10] sm:$0xff]
    %v25 = vld [vmem:[%s0 + $0x18] sm:$0xff]
    %v26 = vld [vmem:[%s0 + $0x20] sm:$0xff]
    %v27 = vld [vmem:[%s0 + $0x28] sm:$0xff]
    %v28 = vld [vmem:[%s0 + $0x30] sm:$0xff]
    %v29 = vld [vmem:[%s0 + $0x38] sm:$0xff]
    %v30 = vld [vmem:[%s0 + $0x40] sm:$0xff]
    %v31 = vld [vmem:[%s0 + $0x48] sm:$0xff]
    %v32 = vld [vmem:[%s0 + $0x50] sm:$0xff]
    %v33 = vld [vmem:[%s0 + $0x58] sm:$0xff]
    %v34 = vld [vmem:[%s0 + $0x60] sm:$0xff]
    %v35 = vld [vmem:[%s0 + $0x68] sm:$0xff]
    %v36 = vld [vmem:[%s0 + $0x70] sm:$0xff]
    %v37 = vld [vmem:[%s0 + $0x78] sm:$0xff]
    %v38 = vld [vmem:[%s0 + $0x80] sm:$0xff]
    %v39 = vld [vmem:[%s0 + $0x88] sm:$0xff]
    %v40 = vld [vmem:[%s0 + $0x90] sm:$0xff]
    %v41 = vld [vmem:[%s0 + $0x98] sm:$0xff]
    %v42 = vld [vmem:[%s0 + $0xa0] sm:$0xff]
    %v43 = vld [vmem:[%s0 + $0xa8] sm:$0xff]
    %v44 = vld [vmem:[%s0 + $0xb0] sm:$0xff]
    %v45 = vld [vmem:[%s0 + $0xb8] sm:$0xff]
    %v46 = vld [vmem:[%s0 + $0xc0] sm:$0xff]
    %v47 = vld [vmem:[%s0 + $0xc8] sm:$0xff]
    %v48 = vld [vmem:[%s0 + $0xd0] sm:$0xff]
    %v49 = vld [vmem:[%s0 + $0xd8] sm:$0xff]
    %v50 = vld [vmem:[%s0 + $0xe0] sm:$0xff]
    %v51 = vld [vmem:[%s0 + $0xe8] sm:$0xff]
    %v52 = vld [vmem:[%s0 + $0xf0] sm:$0xff]
    %v53 = vld [vmem:[%s0 + $0xf8] sm:$0xff]
    %vm54 = vcmask 261120
    %v55 = vsel %vm54, %v22, 0.0
    %v56 = vsel %vm54, %v23, 0.0
    %v57 = vadd.f32 %v55, %v56
    %v58 = vsel %vm54, %v24, 0.0
    %v59 = vadd.f32 %v57, %v58
    %v60 = vsel %vm54, %v25, 0.0
    %v61 = vadd.f32 %v59, %v60
    %v62 = vsel %vm54, %v26, 0.0
    %v63 = vadd.f32 %v61, %v62
    %v64 = vsel %vm54, %v27, 0.0
    %v65 = vadd.f32 %v63, %v64
    %v66 = vsel %vm54, %v28, 0.0
    %v67 = vadd.f32 %v65, %v66
    %v68 = vsel %vm54, %v29, 0.0
    %v69 = vadd.f32 %v67, %v68
    %v70 = vsel %vm54, %v30, 0.0
    %v71 = vadd.f32 %v69, %v70
    %v72 = vsel %vm54, %v31, 0.0
    %v73 = vadd.f32 %v71, %v72
    %v74 = vsel %vm54, %v32, 0.0
    %v75 = vadd.f32 %v73, %v74
    %v76 = vsel %vm54, %v33, 0.0
    %v77 = vadd.f32 %v75, %v76
    %v78 = vsel %vm54, %v34, 0.0
    %v79 = vadd.f32 %v77, %v78
    %v80 = vsel %vm54, %v35, 0.0
    %v81 = vadd.f32 %v79, %v80
    %v82 = vsel %vm54, %v36, 0.0
    %v83 = vadd.f32 %v81, %v82
    %v84 = vsel %vm54, %v37, 0.0
    %v85 = vadd.f32 %v83, %v84
    %v86 = vsel %vm54, %v38, 0.0
    %v87 = vadd.f32 %v85, %v86
    %v88 = vsel %vm54, %v39, 0.0
    %v89 = vadd.f32 %v87, %v88
    %v90 = vsel %vm54, %v40, 0.0
    %v91 = vadd.f32 %v89, %v90
    %v92 = vsel %vm54, %v41, 0.0
    %v93 = vadd.f32 %v91, %v92
    %v94 = vsel %vm54, %v42, 0.0
    %v95 = vadd.f32 %v93, %v94
    %v96 = vsel %vm54, %v43, 0.0
    %v97 = vadd.f32 %v95, %v96
    %v98 = vsel %vm54, %v44, 0.0
    %v99 = vadd.f32 %v97, %v98
    %v100 = vsel %vm54, %v45, 0.0
    %v101 = vadd.f32 %v99, %v100
    %v102 = vsel %vm54, %v46, 0.0
    %v103 = vadd.f32 %v101, %v102
    %v104 = vsel %vm54, %v47, 0.0
    %v105 = vadd.f32 %v103, %v104
    %v106 = vsel %vm54, %v48, 0.0
    %v107 = vadd.f32 %v105, %v106
    %v108 = vsel %vm54, %v49, 0.0
    %v109 = vadd.f32 %v107, %v108
    %v110 = vsel %vm54, %v50, 0.0
    %v111 = vadd.f32 %v109, %v110
    %v112 = vsel %vm54, %v51, 0.0
    %v113 = vadd.f32 %v111, %v112
    %v114 = vsel %vm54, %v52, 0.0
    %v115 = vadd.f32 %v113, %v114
    %v116 = vsel %vm54, %v53, 0.0
    %v117 = vadd.f32 %v115, %v116
    %v118 = vrot.slane %v117, 4
    %v119 = vadd.f32 %v117, %v118
    %v120 = vrot.slane %v119, 2
    %v121 = vadd.f32 %v119, %v120
    %v122 = vrot.slane %v121, 1
    %v123 = vadd.f32 %v121, %v122
    %v124 = vsel %vm54, %v22, -inf
    %v125 = vsel %vm54, %v23, -inf
    %v126 = vsel %vm54, %v24, -inf
    %v127 = vsel %vm54, %v25, -inf
    %v128 = vsel %vm54, %v26, -inf
    %v129 = vmax.f32 %v124, %v128
    %v130 = vsel %vm54, %v27, -inf
    %v131 = vmax.f32 %v125, %v130
    %v132 = vsel %vm54, %v28, -inf
    %v133 = vmax.f32 %v126, %v132
    %v134 = vsel %vm54, %v29, -inf
    %v135 = vmax.f32 %v127, %v134
    %v136 = vsel %vm54, %v30, -inf
    %v137 = vmax.f32 %v129, %v136
    %v138 = vsel %vm54, %v31, -inf
    %v139 = vmax.f32 %v131, %v138
    %v140 = vsel %vm54, %v32, -inf
    %v141 = vmax.f32 %v133, %v140
    %v142 = vsel %vm54, %v33, -inf
    %v143 = vmax.f32 %v135, %v142
    %v144 = vsel %vm54, %v34, -inf
    %v145 = vmax.f32 %v137, %v144
    %v146 = vsel %vm54, %v35, -inf
    %v147 = vmax.f32 %v139, %v146
    %v148 = vsel %vm54, %v36, -inf
    %v149 = vmax.f32 %v141, %v148
    %v150 = vsel %vm54, %v37, -inf
    %v151 = vmax.f32 %v143, %v150
    %v152 = vsel %vm54, %v38, -inf
    %v153 = vmax.f32 %v145, %v152
    %v154 = vsel %vm54, %v39, -inf
    %v155 = vmax.f32 %v147, %v154
    %v156 = vsel %vm54, %v40, -inf
    %v157 = vmax.f32 %v149, %v156
    %v158 = vsel %vm54, %v41, -inf
    %v159 = vmax.f32 %v151, %v158
    %v160 = vsel %vm54, %v42, -inf
    %v161 = vmax.f32 %v153, %v160
    %v162 = vsel %vm54, %v43, -inf
    %v163 = vmax.f32 %v155, %v162
    %v164 = vsel %vm54, %v44, -inf
    %v165 = vmax.f32 %v157, %v164
    %v166 = vsel %vm54, %v45, -inf
    %v167 = vmax.f32 %v159, %v166
    %v168 = vsel %vm54, %v46, -inf
    %v169 = vmax.f32 %v161, %v168
    %v170 = vsel %vm54, %v47, -inf
    %v171 = vmax.f32 %v163, %v170
    %v172 = vsel %vm54, %v48, -inf
    %v173 = vmax.f32 %v165, %v172
    %v174 = vsel %vm54, %v49, -inf
    %v175 = vmax.f32 %v167, %v174
    %v176 = vsel %vm54, %v50, -inf
    %v177 = vmax.f32 %v169, %v176
    %v178 = vsel %vm54, %v51, -inf
    %v179 = vmax.f32 %v171, %v178
    %v180 = vsel %vm54, %v52, -inf
    %v181 = vmax.f32 %v173, %v180
    %v182 = vsel %vm54, %v53, -inf
    %v183 = vmax.f32 %v175, %v182
    %v184 = vmax.f32 %v177, %v179
    %v185 = vmax.f32 %v181, %v183
    %v186 = vmax.f32 %v184, %v185
    %v187 = vrot.slane %v186, 4
    %v188 = vmax.f32 %v186, %v187
    %v189 = vrot.slane %v188, 2
    %v190 = vmax.f32 %v188, %v189
    %v191 = vrot.slane %v190, 1
    %v192 = vmax.f32 %v190, %v191
    %v193 = vld [vmem:[#allocation2] sm:$0x1]
    %v194 = vadd.f32 %v193, %v123
    %vm195 = vcmask 253952
    %196 = vst.msk [vmem:[#allocation2] sm:$0x1] %vm195, %v194
    %v197 = vld [vmem:[#allocation2 + $0x2] sm:$0x1]
    %v198 = vmax.f32 %v197, %v192
    %199 = vst.msk [vmem:[#allocation2 + $0x2] sm:$0x1] %vm195, %v198
    %s200 = scalar_lea.vmem %s0, 256
    %v201 = vld [vmem:[%s200] sm:$0xff]
    %v202 = vld [vmem:[%s200 + $0x8] sm:$0xff]
    %v203 = vld [vmem:[%s200 + $0x10] sm:$0xff]
    %v204 = vld [vmem:[%s200 + $0x18] sm:$0xff]
    %v205 = vld [vmem:[%s200 + $0x20] sm:$0xff]
    %v206 = vld [vmem:[%s200 + $0x28] sm:$0xff]
    %v207 = vld [vmem:[%s200 + $0x30] sm:$0xff]
    %v208 = vld [vmem:[%s200 + $0x38] sm:$0xff]
    %v209 = vld [vmem:[%s200 + $0x40] sm:$0xff]
    %v210 = vld [vmem:[%s200 + $0x48] sm:$0xff]
    %v211 = vld [vmem:[%s200 + $0x50] sm:$0xff]
    %v212 = vld [vmem:[%s200 + $0x58] sm:$0xff]
    %v213 = vld [vmem:[%s200 + $0x60] sm:$0xff]
    %v214 = vld [vmem:[%s200 + $0x68] sm:$0xff]
    %v215 = vld [vmem:[%s200 + $0x70] sm:$0xff]
    %v216 = vld [vmem:[%s200 + $0x78] sm:$0xff]
    %v217 = vld [vmem:[%s200 + $0x80] sm:$0xff]
    %v218 = vld [vmem:[%s200 + $0x88] sm:$0xff]
    %v219 = vld [vmem:[%s200 + $0x90] sm:$0xff]
    %v220 = vld [vmem:[%s200 + $0x98] sm:$0xff]
    %v221 = vld [vmem:[%s200 + $0xa0] sm:$0xff]
    %v222 = vld [vmem:[%s200 + $0xa8] sm:$0xff]
    %v223 = vld [vmem:[%s200 + $0xb0] sm:$0xff]
    %v224 = vld [vmem:[%s200 + $0xb8] sm:$0xff]
    %v225 = vld [vmem:[%s200 + $0xc0] sm:$0xff]
    %v226 = vld [vmem:[%s200 + $0xc8] sm:$0xff]
    %v227 = vld [vmem:[%s200 + $0xd0] sm:$0xff]
    %v228 = vld [vmem:[%s200 + $0xd8] sm:$0xff]
    %v229 = vld [vmem:[%s200 + $0xe0] sm:$0xff]
    %v230 = vld [vmem:[%s200 + $0xe8] sm:$0xff]
    %v231 = vld [vmem:[%s200 + $0xf0] sm:$0xff]
    %v232 = vld [vmem:[%s200 + $0xf8] sm:$0xff]
    %v233 = vsel %vm54, %v201, 0.0
    %v234 = vsel %vm54, %v202, 0.0
    %v235 = vadd.f32 %v233, %v234
    %v236 = vsel %vm54, %v203, 0.0
    %v237 = vadd.f32 %v235, %v236
    %v238 = vsel %vm54, %v204, 0.0
    %v239 = vadd.f32 %v237, %v238
    %v240 = vsel %vm54, %v205, 0.0
    %v241 = vadd.f32 %v239, %v240
    %v242 = vsel %vm54, %v206, 0.0
    %v243 = vadd.f32 %v241, %v242
    %v244 = vsel %vm54, %v207, 0.0
    %v245 = vadd.f32 %v243, %v244
    %v246 = vsel %vm54, %v208, 0.0
    %v247 = vadd.f32 %v245, %v246
    %v248 = vsel %vm54, %v209, 0.0
    %v249 = vadd.f32 %v247, %v248
    %v250 = vsel %vm54, %v210, 0.0
    %v251 = vadd.f32 %v249, %v250
    %v252 = vsel %vm54, %v211, 0.0
    %v253 = vadd.f32 %v251, %v252
    %v254 = vsel %vm54, %v212, 0.0
    %v255 = vadd.f32 %v253, %v254
    %v256 = vsel %vm54, %v213, 0.0
    %v257 = vadd.f32 %v255, %v256
    %v258 = vsel %vm54, %v214, 0.0
    %v259 = vadd.f32 %v257, %v258
    %v260 = vsel %vm54, %v215, 0.0
    %v261 = vadd.f32 %v259, %v260
    %v262 = vsel %vm54, %v216, 0.0
    %v263 = vadd.f32 %v261, %v262
    %v264 = vsel %vm54, %v217, 0.0
    %v265 = vadd.f32 %v263, %v264
    %v266 = vsel %vm54, %v218, 0.0
    %v267 = vadd.f32 %v265, %v266
    %v268 = vsel %vm54, %v219, 0.0
    %v269 = vadd.f32 %v267, %v268
    %v270 = vsel %vm54, %v220, 0.0
    %v271 = vadd.f32 %v269, %v270
    %v272 = vsel %vm54, %v221, 0.0
    %v273 = vadd.f32 %v271, %v272
    %v274 = vsel %vm54, %v222, 0.0
    %v275 = vadd.f32 %v273, %v274
    %v276 = vsel %vm54, %v223, 0.0
    %v277 = vadd.f32 %v275, %v276
    %v278 = vsel %vm54, %v224, 0.0
    %v279 = vadd.f32 %v277, %v278
    %v280 = vsel %vm54, %v225, 0.0
    %v281 = vadd.f32 %v279, %v280
    %v282 = vsel %vm54, %v226, 0.0
    %v283 = vadd.f32 %v281, %v282
    %v284 = vsel %vm54, %v227, 0.0
    %v285 = vadd.f32 %v283, %v284
    %v286 = vsel %vm54, %v228, 0.0
    %v287 = vadd.f32 %v285, %v286
    %v288 = vsel %vm54, %v229, 0.0
    %v289 = vadd.f32 %v287, %v288
    %v290 = vsel %vm54, %v230, 0.0
    %v291 = vadd.f32 %v289, %v290
    %v292 = vsel %vm54, %v231, 0.0
    %v293 = vadd.f32 %v291, %v292
    %v294 = vsel %vm54, %v232, 0.0
    %v295 = vadd.f32 %v293, %v294
    %v296 = vrot.slane %v295, 4
    %v297 = vadd.f32 %v295, %v296
    %v298 = vrot.slane %v297, 2
    %v299 = vadd.f32 %v297, %v298
    %v300 = vrot.slane %v299, 1
    %v301 = vadd.f32 %v299, %v300
    %v302 = vsel %vm54, %v201, -inf
    %v303 = vsel %vm54, %v202, -inf
    %v304 = vsel %vm54, %v203, -inf
    %v305 = vsel %vm54, %v204, -inf
    %v306 = vsel %vm54, %v205, -inf
    %v307 = vmax.f32 %v302, %v306
    %v308 = vsel %vm54, %v206, -inf
    %v309 = vmax.f32 %v303, %v308
    %v310 = vsel %vm54, %v207, -inf
    %v311 = vmax.f32 %v304, %v310
    %v312 = vsel %vm54, %v208, -inf
    %v313 = vmax.f32 %v305, %v312
    %v314 = vsel %vm54, %v209, -inf
    %v315 = vmax.f32 %v307, %v314
    %v316 = vsel %vm54, %v210, -inf
    %v317 = vmax.f32 %v309, %v316
    %v318 = vsel %vm54, %v211, -inf
    %v319 = vmax.f32 %v311, %v318
    %v320 = vsel %vm54, %v212, -inf
    %v321 = vmax.f32 %v313, %v320
    %v322 = vsel %vm54, %v213, -inf
    %v323 = vmax.f32 %v315, %v322
    %v324 = vsel %vm54, %v214, -inf
    %v325 = vmax.f32 %v317, %v324
    %v326 = vsel %vm54, %v215, -inf
    %v327 = vmax.f32 %v319, %v326
    %v328 = vsel %vm54, %v216, -inf
    %v329 = vmax.f32 %v321, %v328
    %v330 = vsel %vm54, %v217, -inf
    %v331 = vmax.f32 %v323, %v330
    %v332 = vsel %vm54, %v218, -inf
    %v333 = vmax.f32 %v325, %v332
    %v334 = vsel %vm54, %v219, -inf
    %v335 = vmax.f32 %v327, %v334
    %v336 = vsel %vm54, %v220, -inf
    %v337 = vmax.f32 %v329, %v336
    %v338 = vsel %vm54, %v221, -inf
    %v339 = vmax.f32 %v331, %v338
    %v340 = vsel %vm54, %v222, -inf
    %v341 = vmax.f32 %v333, %v340
    %v342 = vsel %vm54, %v223, -inf
    %v343 = vmax.f32 %v335, %v342
    %v344 = vsel %vm54, %v224, -inf
    %v345 = vmax.f32 %v337, %v344
    %v346 = vsel %vm54, %v225, -inf
    %v347 = vmax.f32 %v339, %v346
    %v348 = vsel %vm54, %v226, -inf
    %v349 = vmax.f32 %v341, %v348
    %v350 = vsel %vm54, %v227, -inf
    %v351 = vmax.f32 %v343, %v350
    %v352 = vsel %vm54, %v228, -inf
    %v353 = vmax.f32 %v345, %v352
    %v354 = vsel %vm54, %v229, -inf
    %v355 = vmax.f32 %v347, %v354
    %v356 = vsel %vm54, %v230, -inf
    %v357 = vmax.f32 %v349, %v356
    %v358 = vsel %vm54, %v231, -inf
    %v359 = vmax.f32 %v351, %v358
    %v360 = vsel %vm54, %v232, -inf
    %v361 = vmax.f32 %v353, %v360
    %v362 = vmax.f32 %v355, %v357
    %v363 = vmax.f32 %v359, %v361
    %v364 = vmax.f32 %v362, %v363
    %v365 = vrot.slane %v364, 4
    %v366 = vmax.f32 %v364, %v365
    %v367 = vrot.slane %v366, 2
    %v368 = vmax.f32 %v366, %v367
    %v369 = vrot.slane %v368, 1
    %v370 = vmax.f32 %v368, %v369
    %v371 = vld [vmem:[#allocation2 + $0x1] sm:$0x1]
    %v372 = vadd.f32 %v371, %v301
    %373 = vst.msk [vmem:[#allocation2 + $0x1] sm:$0x1] %vm195, %v372
    %v374 = vld [vmem:[#allocation2 + $0x3] sm:$0x1]
    %v375 = vmax.f32 %v374, %v370
    %376 = vst.msk [vmem:[#allocation2 + $0x3] sm:$0x1] %vm195, %v375
    // Predicated region
    $region18: #{tpu_custom_call.1} parent=1 // pred_check
      %p377 = pneg %p15
    $region19: #{tpu_custom_call.1} parent=1 // pred_check_branch
      %379 = sbr.rel (%p377) target = $region21
    $region20: #{tpu_custom_call.1} parent=1 // pred_region
      %v380 = vld [vmem:[#allocation2] sm:$0xf]
      %v381 = vlaneseq
      %v382 = vshrl.u32 %v381, 7
      %vm383 = vcmp.lt.s32.totalorder %v382, 2
      %v384 = vmul.f32 %v380, 0.00390625
      %v385 = vsel %vm383, %v384, %v380
      %v386 = vld [vmem:[%s1] sm:$0xff]
      %v387 = vld [vmem:[%s1 + $0x8] sm:$0xff]
      %v388 = vld [vmem:[%s1 + $0x10] sm:$0xff]
      %v389 = vld [vmem:[%s1 + $0x18] sm:$0xff]
      %v391 = vsel %vm54, %v385, 0
      %393 = vmatprep.subr.mxu0 0.0
      %394 = vmatpush1.msra.mxu0 0.0
      %395 = vmatprep.subr.mxu0 0.0
      %396 = vmatpush1.msra.mxu0 0.0
      %397 = vmatprep.subr.mxu0 0.0
      %398 = vmatpush1.msra.mxu0 0.0
      %399 = vmatprep.subr.mxu0 0.0
      %400 = vmatpush1.msra.mxu0 0.0
      %401 = vmatprep.subr.mxu0 0.0
      %402 = vmatpush1.msra.mxu0 0.0
      %403 = vmatprep.subr.mxu0 0.0
      %404 = vmatpush1.msra.mxu0 0.0
      %405 = vmatprep.subr.mxu0 0.0
      %406 = vmatpush1.msra.mxu0 0.0
      %407 = vmatprep.subr.mxu0 0.0
      %408 = vmatpush1.msra.mxu0 0.0
      %409 = vmatprep.subr.mxu0 0.0
      %410 = vmatpush1.msra.mxu0 0.0
      %411 = vmatprep.subr.mxu0 0.0
      %412 = vmatpush1.msra.mxu0 0.0
      %413 = vmatprep.subr.mxu0 0.0
      %414 = vmatpush1.msra.mxu0 0.0
      %415 = vmatprep.subr.mxu0 0.0
      %416 = vmatpush1.msra.mxu0 0.0
      %417 = vmatprep.subr.mxu0 0.0
      %418 = vmatpush1.msra.mxu0 %v389
      %419 = vmatprep.subr.mxu0 0.0
      %420 = vmatpush1.msra.mxu0 %v388
      %421 = vmatprep.subr.mxu0 0.0
      %422 = vmatpush1.msra.mxu0 %v387
      %423 = vmatprep.subr.mxu0 0.0
      %424 = vmatpush1.msra.mxu0 %v386
      %425 = vmatprep.subr.mxu0 0.0
      %426 = vmatpush2.msra.mxu0 0.0
      %427 = vmatprep.subr.mxu0 0.0
      %428 = vmatpush2.msra.mxu0 0.0
      %429 = vmatprep.subr.mxu0 0.0
      %430 = vmatpush2.msra.mxu0 0.0
      %431 = vmatprep.subr.mxu0 0.0
      %432 = vmatpush2.msra.mxu0 0.0
      %433 = vmatprep.subr.mxu0 0.0
      %434 = vmatpush2.msra.mxu0 0.0
      %435 = vmatprep.subr.mxu0 0.0
      %436 = vmatpush2.msra.mxu0 0.0
      %437 = vmatprep.subr.mxu0 0.0
      %438 = vmatpush2.msra.mxu0 0.0
      %439 = vmatprep.subr.mxu0 0.0
      %440 = vmatpush2.msra.mxu0 0.0
      %441 = vmatprep.subr.mxu0 0.0
      %442 = vmatpush2.msra.mxu0 0.0
      %443 = vmatprep.subr.mxu0 0.0
      %444 = vmatpush2.msra.mxu0 0.0
      %445 = vmatprep.subr.mxu0 0.0
      %446 = vmatpush2.msra.mxu0 0.0
      %447 = vmatprep.subr.mxu0 0.0
      %448 = vmatpush2.msra.mxu0 0.0
      %449 = vmatprep.subr.mxu0 0.0
      %450 = vmatpush2.msra.mxu0 0.0
      %451 = vmatprep.subr.mxu0 0.0
      %452 = vmatpush2.msra.mxu0 0.0
      %453 = vmatprep.subr.mxu0 0.0
      %454 = vmatpush2.msra.mxu0 0.0
      %455 = vmatprep.subr.mxu0 0.0
      %456 = vmatpush2.msra.mxu0 0.0
      %457 = vmatprep.mubr.f32.mxu0 0.0
      %458 = vmatmul.mubr.f32.gmra.mxu0 %v391
      %v459 = vpop.f32.mrf.mxu0
      %v460 = vadd.f32 0.0, %v459
      %v461 = vpop.f32.mrf.mxu0
      %462 = vdwg.mxu0
      %v463 = vmax.f32 %v460, 0.0
      %v464 = vld [vmem:[%s2] sm:$0x3]
      %vm465 = vcmask 15360
      %v467 = vsel %vm465, %v463, 0
      %vm469 = vcmask 1041408
      %v471 = vsel %vm469, %v464, 0
      %473 = vmatprep.subr.mxu0 0.0
      %474 = vmatpush1.msra.mxu0 0.0
      %475 = vmatprep.subr.mxu0 0.0
      %476 = vmatpush1.msra.mxu0 0.0
      %477 = vmatprep.subr.mxu0 0.0
      %478 = vmatpush1.msra.mxu0 0.0
      %479 = vmatprep.subr.mxu0 0.0
      %480 = vmatpush1.msra.mxu0 0.0
      %481 = vmatprep.subr.mxu0 0.0
      %482 = vmatpush1.msra.mxu0 0.0
      %483 = vmatprep.subr.mxu0 0.0
      %484 = vmatpush1.msra.mxu0 0.0
      %485 = vmatprep.subr.mxu0 0.0
      %486 = vmatpush1.msra.mxu0 0.0
      %487 = vmatprep.subr.mxu0 0.0
      %488 = vmatpush1.msra.mxu0 0.0
      %489 = vmatprep.subr.mxu0 0.0
      %490 = vmatpush1.msra.mxu0 0.0
      %491 = vmatprep.subr.mxu0 0.0
      %492 = vmatpush1.msra.mxu0 0.0
      %493 = vmatprep.subr.mxu0 0.0
      %494 = vmatpush1.msra.mxu0 0.0
      %495 = vmatprep.subr.mxu0 0.0
      %496 = vmatpush1.msra.mxu0 0.0
      %497 = vmatprep.subr.mxu0 0.0
      %498 = vmatpush1.msra.mxu0 0.0
      %499 = vmatprep.subr.mxu0 0.0
      %500 = vmatpush1.msra.mxu0 0.0
      %501 = vmatprep.subr.mxu0 0.0
      %502 = vmatpush1.msra.mxu0 0.0
      %503 = vmatprep.subr.mxu0 0.0
      %504 = vmatpush1.msra.mxu0 %v471
      %505 = vmatprep.subr.mxu0 0.0
      %506 = vmatpush2.msra.mxu0 0.0
      %507 = vmatprep.subr.mxu0 0.0
      %508 = vmatpush2.msra.mxu0 0.0
      %509 = vmatprep.subr.mxu0 0.0
      %510 = vmatpush2.msra.mxu0 0.0
      %511 = vmatprep.subr.mxu0 0.0
      %512 = vmatpush2.msra.mxu0 0.0
      %513 = vmatprep.subr.mxu0 0.0
      %514 = vmatpush2.msra.mxu0 0.0
      %515 = vmatprep.subr.mxu0 0.0
      %516 = vmatpush2.msra.mxu0 0.0
      %517 = vmatprep.subr.mxu0 0.0
      %518 = vmatpush2.msra.mxu0 0.0
      %519 = vmatprep.subr.mxu0 0.0
      %520 = vmatpush2.msra.mxu0 0.0
      %521 = vmatprep.subr.mxu0 0.0
      %522 = vmatpush2.msra.mxu0 0.0
      %523 = vmatprep.subr.mxu0 0.0
      %524 = vmatpush2.msra.mxu0 0.0
      %525 = vmatprep.subr.mxu0 0.0
      %526 = vmatpush2.msra.mxu0 0.0
      %527 = vmatprep.subr.mxu0 0.0
      %528 = vmatpush2.msra.mxu0 0.0
      %529 = vmatprep.subr.mxu0 0.0
      %530 = vmatpush2.msra.mxu0 0.0
      %531 = vmatprep.subr.mxu0 0.0
      %532 = vmatpush2.msra.mxu0 0.0
      %533 = vmatprep.subr.mxu0 0.0
      %534 = vmatpush2.msra.mxu0 0.0
      %535 = vmatprep.subr.mxu0 0.0
      %536 = vmatpush2.msra.mxu0 0.0
      %537 = vmatprep.mubr.f32.mxu0 0.0
      %538 = vmatmul.mubr.f32.gmra.mxu0 %v467
      %v539 = vpop.f32.mrf.mxu0
      %v540 = vadd.f32 0.0, %v539
      %v541 = vpop.f32.mrf.mxu0
      %542 = vdwg.mxu0
      %v544 = vrot.slane %v540, 2
      %v546 = vadd.f32 %v540, %v544
      %v547 = vsub.f32 0.0, %v546
      %v548 = vmul.f32 %v547, 1.442695
      %v549 = vpow.pop %v548
      %v550 = vadd.f32 %v549, 1.0
      %v551 = vrcp.pop %v550
      %v552 = vmul.f32 1.0, %v551
      %vm553 = vcmask 254976
      %554 = vst.msk [vmem:[#allocation3] sm:$0x3] %vm553, %v552
    $region21: #{tpu_custom_call.1} parent=1 // pred_fallthru
      _
    // Predicated region
    $region22: #{tpu_custom_call.1} parent=1 // pred_check
      _
    $region23: #{tpu_custom_call.1} parent=1 // pred_check_branch
      %556 = sbr.rel (0) target = $region25
    $region24: #{tpu_custom_call.1} parent=1 // pred_region
      %s558 = ssub.s32 32, 32
      %559 = vsyncadd [#allocation4], %s558
      %s561 = sshll.u32 [#allocation3], 4
      %s562 = int_to_ptr.vmem [resolvable:$true] %s561
      %564 = dma.vmem_to_hbm [thread:$0]  %s562, 32, %s3, [#allocation4]
    $region25: #{tpu_custom_call.1} parent=1 // pred_fallthru
      _
    // Predicated region
    $region26: #{tpu_custom_call.1} parent=1 // pred_check
      _
    $region27: #{tpu_custom_call.1} parent=1 // pred_check_branch
      %566 = sbr.rel (0) target = $region29
    $region28: #{tpu_custom_call.1} parent=1 // pred_region
      %567 = dma.done [#allocation4], 32
    $region29: #{tpu_custom_call.1} parent=1 // pred_fallthru
      _
    %568 = vsyncpa [#allocation4], 1

</llo_original>
